<compile_context>
chip_gen: v7x
topology: tpu7x:2x2x1
jax: 0.10.0
libtpu: 0.0.40
codegen_flags: <defaults>
</compile_context>

<pallas_src>
import jax
import jax.numpy as jnp
from jax.experimental import pallas as pl
from jax.experimental.pallas import tpu as pltpu


def _round_up(n, m):
    return ((n + m - 1) // m) * m


def mlp_mask_kernel(x_ref,
                    w1_ref, b1_ref, a1_ref,
                    w2_ref, b2_ref, a2_ref,
                    w3_ref, b3_ref,
                    o_ref):
    cd = w1_ref.dtype                                  # compute (MXU input) dtype

    # In-kernel f32 -> bf16 cast of the activation tile (mask_1 is already
    # folded into w1, so no per-tile mask multiply).
    x = x_ref[...].astype(cd)                          # [TB, D_in]

    # layer 1: Linear -> PReLU -> BinarySTE mask.
    # PReLU(h) * (PReLU(h) > 0) == max(PReLU(h), 0) exactly, for any slope.
    h = jnp.dot(x, w1_ref[...], preferred_element_type=jnp.float32) + b1_ref[...]
    a1 = a1_ref[0, 0]                                  # PReLU slope (SMEM scalar)
    h = jnp.maximum(jnp.where(h > 0, h, a1 * h), 0.0)  # f32 elementwise

    # layer 2: Linear -> PReLU -> BinarySTE mask.
    h = jnp.dot(h.astype(cd), w2_ref[...],
                preferred_element_type=jnp.float32) + b2_ref[...]
    a2 = a2_ref[0, 0]
    h = jnp.maximum(jnp.where(h > 0, h, a2 * h), 0.0)

    # classifier (narrow output: block last dim == full array last dim)
    o_ref[...] = (jnp.dot(h.astype(cd), w3_ref[...],
                          preferred_element_type=jnp.float32)
                  + b3_ref[...]).astype(o_ref.dtype)


def mlp_with_mask(x, params, *, tb=32768, compute_dtype=jnp.bfloat16):
    """x: [B, input_dim] float32.  params: dict from init_params()."""
    B, D_in = x.shape
    H1 = params["w1"].shape[1]
    H2 = params["w2"].shape[1]
    out_dim = params["w3"].shape[1]

    cd = compute_dtype

    # Fold the learnable input-feature mask into w1 (exact:
    # (x * m) @ W == x @ (diag(m) W)).  One-time op on a tiny weight,
    # not a per-batch pass.  Forward/inference-only trick.
    w1 = (params["mask_1"].reshape(-1, 1) * params["w1"]).astype(cd)
    w2 = params["w2"].astype(cd)
    w3 = params["w3"].astype(cd)
    b1 = params["b1"]                       # biases stay f32 (added post-MXU)
    b2 = params["b2"]
    b3 = params["b3"]
    a1 = params["a1"]
    a2 = params["a2"]

    # Batch tile: multiple of 8 (f32 sublanes).  Aim for a grid of >= 2 tiles
    # so both v7x TensorCores get work on the "parallel" axis; cap TB so the
    # double-buffered x (f32) + out (f32, out_dim wide) tiles stay ~10 MiB
    # even at TB=32768 -- comfortably inside v7x's 64 MiB physical VMEM.
    TB = max(8, min(tb, _round_up(pl.cdiv(B, 2), 8)))
    grid = (pl.cdiv(B, TB),)   # partial last block: pad-read / masked write

    def const(shape):                       # resident operand: DMA'd once
        return pl.BlockSpec(shape, lambda i: (0, 0))

    smem = pl.BlockSpec(memory_space=pltpu.MemorySpace.SMEM)

    out = pl.pallas_call(
        mlp_mask_kernel,
        out_shape=jax.ShapeDtypeStruct((B, out_dim), jnp.float32),
        grid=grid,
        in_specs=[
            pl.BlockSpec((TB, D_in), lambda i: (i, 0)),   # x: f32, cast in-kernel
            const((D_in, H1)), const((1, H1)), smem,      # w1 (mask folded), b1, a1
            const((H1, H2)), const((1, H2)), smem,        # w2, b2, a2
            const((H2, out_dim)), const((1, out_dim)),    # w3, b3 (narrow output)
        ],
        out_specs=pl.BlockSpec((TB, out_dim), lambda i: (i, 0)),
        compiler_params=pltpu.CompilerParams(
            dimension_semantics=("parallel",),            # megacore-shard batch
            vmem_limit_bytes=48 * 1024 * 1024,            # safe on v7x's 64 MiB
        ),
    )(x, w1, b1, a1, w2, b2, a2, w3, b3)

    return out


def init_params(key, input_dim, hidden_dim_1, hidden_dim_2, output_dim):
    """Parameter init mirroring the PyTorch module's shapes.

    Linear weights stored as [in, out] (transposed vs. torch's [out, in]);
    masks init to ones; PReLU slope init to 0.25 (torch default).
    """
    ks = jax.random.split(key, 6)

    def linear(kw, kb, din, dout):
        bound = 1.0 / jnp.sqrt(din)
        w = jax.random.uniform(kw, (din, dout), jnp.float32, -bound, bound)
        b = jax.random.uniform(kb, (1, dout), jnp.float32, -bound, bound)
        return w, b

    w1, b1 = linear(ks[0], ks[1], input_dim, hidden_dim_1)
    w2, b2 = linear(ks[2], ks[3], hidden_dim_1, hidden_dim_2)
    w3, b3 = linear(ks[4], ks[5], hidden_dim_2, output_dim)

    return {
        "mask_1": jnp.ones((1, input_dim), jnp.float32),
        "w1": w1, "b1": b1, "a1": jnp.full((1, 1), 0.25, jnp.float32),
        "w2": w2, "b2": b2, "a2": jnp.full((1, 1), 0.25, jnp.float32),
        "w3": w3, "b3": b3,
    }


def reference_forward(x, p, compute_dtype=jnp.bfloat16):
    """Plain-JAX reference with the same mixed-precision choices."""
    cd = compute_dtype
    h = x.astype(cd) * p["mask_1"].astype(cd)
    h = jnp.dot(h, p["w1"].astype(cd), preferred_element_type=jnp.float32) + p["b1"]
    h = jnp.where(h > 0, h, p["a1"] * h)
    h = h * (h > 0)
    h = jnp.dot(h.astype(cd), p["w2"].astype(cd),
                preferred_element_type=jnp.float32) + p["b2"]
    h = jnp.where(h > 0, h, p["a2"] * h)
    h = h * (h > 0)
    return jnp.dot(h.astype(cd), p["w3"].astype(cd),
                   preferred_element_type=jnp.float32) + p["b3"]


if __name__ == "__main__":
    input_dim, hidden_dim_1, hidden_dim_2, output_dim = 32, 64, 16, 8
    batch = 4

    key = jax.random.PRNGKey(0)
    k_x, k_p = jax.random.split(key)
    x = jax.random.normal(k_x, (batch, input_dim), jnp.float32)
    params = init_params(k_p, input_dim, hidden_dim_1, hidden_dim_2, output_dim)

    out = jax.block_until_ready(mlp_with_mask(x, params))
    ref = reference_forward(x, params)

    assert out.shape == (batch, output_dim)
    assert jnp.allclose(out, ref, atol=2e-2, rtol=2e-2), \
        float(jnp.max(jnp.abs(out - ref)))

    print("KERNEL_OK")
</pallas_src>

<mosaic_0001>
module attributes {stable_mosaic.version = 11 : i64} {
  func.func @mlp_mask_kernel(%arg0: i32, %arg1: memref<8x32xf32, #tpu.memory_space<vmem>>, %arg2: memref<32x64xbf16, #tpu.memory_space<vmem>>, %arg3: memref<1x64xf32, #tpu.memory_space<vmem>>, %arg4: memref<1x1xf32, #tpu.memory_space<smem>>, %arg5: memref<64x16xbf16, #tpu.memory_space<vmem>>, %arg6: memref<1x16xf32, #tpu.memory_space<vmem>>, %arg7: memref<1x1xf32, #tpu.memory_space<smem>>, %arg8: memref<16x8xbf16, #tpu.memory_space<vmem>>, %arg9: memref<1x8xf32, #tpu.memory_space<vmem>>, %arg10: memref<8x8xf32, #tpu.memory_space<vmem>>) attributes {dimension_semantics = [#tpu.dimension_semantics<parallel>], iteration_bounds = array<i64: 1>, scalar_prefetch = 0 : i64, scratch_operands = 0 : i64, tpu.core_type = #tpu.core_type<tc>, window_params = [{transform_indices = @transform_0, window_bounds = array<i64: 8, 32>}, {pipeline_mode = #tpu.pipeline_mode<synchronous>, transform_indices = @transform_1, window_bounds = array<i64: 32, 64>}, {pipeline_mode = #tpu.pipeline_mode<synchronous>, transform_indices = @transform_2, window_bounds = array<i64: 1, 64>}, {transform_indices = @transform_3, window_bounds = array<i64: 1, 1>}, {pipeline_mode = #tpu.pipeline_mode<synchronous>, transform_indices = @transform_4, window_bounds = array<i64: 64, 16>}, {pipeline_mode = #tpu.pipeline_mode<synchronous>, transform_indices = @transform_5, window_bounds = array<i64: 1, 16>}, {transform_indices = @transform_6, window_bounds = array<i64: 1, 1>}, {pipeline_mode = #tpu.pipeline_mode<synchronous>, transform_indices = @transform_7, window_bounds = array<i64: 16, 8>}, {pipeline_mode = #tpu.pipeline_mode<synchronous>, transform_indices = @transform_8, window_bounds = array<i64: 1, 8>}, {transform_indices = @transform_9, window_bounds = array<i64: 8, 8>}]} {
    %c0 = arith.constant 0 : index
    %c0_0 = arith.constant 0 : index
    %0 = vector.load %arg1[%c0, %c0_0] : memref<8x32xf32, #tpu.memory_space<vmem>>, vector<8x32xf32>
    %1 = arith.truncf %0 : vector<8x32xf32> to vector<8x32xbf16>
    %c0_1 = arith.constant 0 : index
    %c0_2 = arith.constant 0 : index
    %2 = vector.load %arg2[%c0_1, %c0_2] : memref<32x64xbf16, #tpu.memory_space<vmem>>, vector<32x64xbf16>
    %cst = arith.constant dense<0.000000e+00> : vector<8x64xf32>
    %3 = tpu.matmul %1, %2, %cst {dimension_numbers = #tpu.dot_dimension_numbers<[1], [0], [0], [1], [0, 0, 1, 1], [], []>} : vector<8x32xbf16>, vector<32x64xbf16>, vector<8x64xf32> -> vector<8x64xf32>
    %c0_3 = arith.constant 0 : index
    %c0_4 = arith.constant 0 : index
    %4 = vector.load %arg3[%c0_3, %c0_4] : memref<1x64xf32, #tpu.memory_space<vmem>>, vector<1x64xf32>
    %5 = vector.broadcast %4 : vector<1x64xf32> to vector<8x64xf32>
    %6 = arith.addf %3, %5 : vector<8x64xf32>
    %c0_5 = arith.constant 0 : index
    %c0_6 = arith.constant 0 : index
    %7 = memref.load %arg4[%c0_5, %c0_6] : memref<1x1xf32, #tpu.memory_space<smem>>
    %cst_7 = arith.constant 0.000000e+00 : f32
    %8 = vector.broadcast %cst_7 : f32 to vector<8x64xf32>
    %9 = arith.cmpf ogt, %6, %8 : vector<8x64xf32>
    %10 = vector.broadcast %7 : f32 to vector<8x64xf32>
    %11 = arith.mulf %10, %6 : vector<8x64xf32>
    %12 = arith.select %9, %6, %11 : vector<8x64xi1>, vector<8x64xf32>
    %cst_8 = arith.constant 0.000000e+00 : f32
    %13 = vector.broadcast %cst_8 : f32 to vector<8x64xf32>
    %14 = arith.maximumf %12, %13 : vector<8x64xf32>
    %15 = arith.truncf %14 : vector<8x64xf32> to vector<8x64xbf16>
    %c0_9 = arith.constant 0 : index
    %c0_10 = arith.constant 0 : index
    %16 = vector.load %arg5[%c0_9, %c0_10] : memref<64x16xbf16, #tpu.memory_space<vmem>>, vector<64x16xbf16>
    %cst_11 = arith.constant dense<0.000000e+00> : vector<8x16xf32>
    %17 = tpu.matmul %15, %16, %cst_11 {dimension_numbers = #tpu.dot_dimension_numbers<[1], [0], [0], [1], [0, 0, 1, 1], [], []>} : vector<8x64xbf16>, vector<64x16xbf16>, vector<8x16xf32> -> vector<8x16xf32>
    %c0_12 = arith.constant 0 : index
    %c0_13 = arith.constant 0 : index
    %18 = vector.load %arg6[%c0_12, %c0_13] : memref<1x16xf32, #tpu.memory_space<vmem>>, vector<1x16xf32>
    %19 = vector.broadcast %18 : vector<1x16xf32> to vector<8x16xf32>
    %20 = arith.addf %17, %19 : vector<8x16xf32>
    %c0_14 = arith.constant 0 : index
    %c0_15 = arith.constant 0 : index
    %21 = memref.load %arg7[%c0_14, %c0_15] : memref<1x1xf32, #tpu.memory_space<smem>>
    %cst_16 = arith.constant 0.000000e+00 : f32
    %22 = vector.broadcast %cst_16 : f32 to vector<8x16xf32>
    %23 = arith.cmpf ogt, %20, %22 : vector<8x16xf32>
    %24 = vector.broadcast %21 : f32 to vector<8x16xf32>
    %25 = arith.mulf %24, %20 : vector<8x16xf32>
    %26 = arith.select %23, %20, %25 : vector<8x16xi1>, vector<8x16xf32>
    %cst_17 = arith.constant 0.000000e+00 : f32
    %27 = vector.broadcast %cst_17 : f32 to vector<8x16xf32>
    %28 = arith.maximumf %26, %27 : vector<8x16xf32>
    %29 = arith.truncf %28 : vector<8x16xf32> to vector<8x16xbf16>
    %c0_18 = arith.constant 0 : index
    %c0_19 = arith.constant 0 : index
    %30 = vector.load %arg8[%c0_18, %c0_19] : memref<16x8xbf16, #tpu.memory_space<vmem>>, vector<16x8xbf16>
    %cst_20 = arith.constant dense<0.000000e+00> : vector<8x8xf32>
    %31 = tpu.matmul %29, %30, %cst_20 {dimension_numbers = #tpu.dot_dimension_numbers<[1], [0], [0], [1], [0, 0, 1, 1], [], []>} : vector<8x16xbf16>, vector<16x8xbf16>, vector<8x8xf32> -> vector<8x8xf32>
    %c0_21 = arith.constant 0 : index
    %c0_22 = arith.constant 0 : index
    %32 = vector.load %arg9[%c0_21, %c0_22] : memref<1x8xf32, #tpu.memory_space<vmem>>, vector<1x8xf32>
    %33 = vector.broadcast %32 : vector<1x8xf32> to vector<8x8xf32>
    %34 = arith.addf %31, %33 : vector<8x8xf32>
    %c0_23 = arith.constant 0 : index
    %c0_24 = arith.constant 0 : index
    %35 = vector.load %arg10[%c0_23, %c0_24] : memref<8x8xf32, #tpu.memory_space<vmem>>, vector<8x8xf32>
    tpu.vector_store %arg10[%c0_23, %c0_24], %34 {strides = array<i32>} : memref<8x8xf32, #tpu.memory_space<vmem>>, vector<8x8xf32>,
    return
  }
  func.func @transform_0(%arg0: i32) -> (i32, i32) {
    %c0_i32 = arith.constant 0 : i32
    %c0_i32_0 = arith.constant 0 : i32
    return %arg0, %c0_i32 : i32, i32
  }
  func.func @transform_1(%arg0: i32) -> (i32, i32) {
    %c0_i32 = arith.constant 0 : i32
    %c0_i32_0 = arith.constant 0 : i32
    %c0_i32_1 = arith.constant 0 : i32
    return %c0_i32, %c0_i32_0 : i32, i32
  }
  func.func @transform_2(%arg0: i32) -> (i32, i32) {
    %c0_i32 = arith.constant 0 : i32
    %c0_i32_0 = arith.constant 0 : i32
    %c0_i32_1 = arith.constant 0 : i32
    return %c0_i32, %c0_i32_0 : i32, i32
  }
  func.func @transform_3(%arg0: i32) -> (i32, i32) {
    %c0_i32 = arith.constant 0 : i32
    %c0_i32_0 = arith.constant 0 : i32
    %c0_i32_1 = arith.constant 0 : i32
    return %c0_i32, %c0_i32_0 : i32, i32
  }
  func.func @transform_4(%arg0: i32) -> (i32, i32) {
    %c0_i32 = arith.constant 0 : i32
    %c0_i32_0 = arith.constant 0 : i32
    %c0_i32_1 = arith.constant 0 : i32
    return %c0_i32, %c0_i32_0 : i32, i32
  }
  func.func @transform_5(%arg0: i32) -> (i32, i32) {
    %c0_i32 = arith.constant 0 : i32
    %c0_i32_0 = arith.constant 0 : i32
    %c0_i32_1 = arith.constant 0 : i32
    return %c0_i32, %c0_i32_0 : i32, i32
  }
  func.func @transform_6(%arg0: i32) -> (i32, i32) {
    %c0_i32 = arith.constant 0 : i32
    %c0_i32_0 = arith.constant 0 : i32
    %c0_i32_1 = arith.constant 0 : i32
    return %c0_i32, %c0_i32_0 : i32, i32
  }
  func.func @transform_7(%arg0: i32) -> (i32, i32) {
    %c0_i32 = arith.constant 0 : i32
    %c0_i32_0 = arith.constant 0 : i32
    %c0_i32_1 = arith.constant 0 : i32
    return %c0_i32, %c0_i32_0 : i32, i32
  }
  func.func @transform_8(%arg0: i32) -> (i32, i32) {
    %c0_i32 = arith.constant 0 : i32
    %c0_i32_0 = arith.constant 0 : i32
    %c0_i32_1 = arith.constant 0 : i32
    return %c0_i32, %c0_i32_0 : i32, i32
  }
  func.func @transform_9(%arg0: i32) -> (i32, i32) {
    %c0_i32 = arith.constant 0 : i32
    %c0_i32_0 = arith.constant 0 : i32
    return %arg0, %c0_i32 : i32, i32
  }
}

</mosaic_0001>

<llo_original>
// kernel: tpu_custom_call.1
$region0: #{tpu_custom_call.1}
  #allocation0 [shape = 'u32[]', space=smem, size = 0x4, offset = 0x4, fixed_abs, tag = 'smem constant byte address 0x4 - core index']
  #allocation1 [shape = 'u32[144,128]{1,0:T(1,128)}', space=vmem, size = 0x12000, scoped, tag = 'internal scratch']
  #allocation2 [shape = 'f32[1,1]{1,0:T(1,128)S(6)}', space=smem, size = 0x200, scoped, tag = 'scoped memory for tpu_custom_call.1']
  #allocation3 [shape = 'f32[1,1]{1,0:T(1,128)S(6)}', space=smem, size = 0x200, scoped, tag = 'scoped memory for tpu_custom_call.1']
  %s0 = inlined_call_operand.vmem [shape: f32[4,32], index: 0, kind: input, shape index: {}]
  %s1 = inlined_call_operand.vmem [shape: bf16[32,64], index: 1, kind: input, shape index: {}]
  %s2 = inlined_call_operand.vmem [shape: f32[1,64], index: 2, kind: input, shape index: {}]
  %s3 = inlined_call_operand.<no memory space> [shape: f32[1,1], index: 3, kind: input, shape index: {}]
  %s4 = inlined_call_operand.vmem [shape: bf16[64,16], index: 4, kind: input, shape index: {}]
  %s5 = inlined_call_operand.vmem [shape: f32[1,16], index: 5, kind: input, shape index: {}]
  %s6 = inlined_call_operand.<no memory space> [shape: f32[1,1], index: 6, kind: input, shape index: {}]
  %s7 = inlined_call_operand.vmem [shape: bf16[16,8], index: 7, kind: input, shape index: {}]
  %s8 = inlined_call_operand.vmem [shape: f32[1,8], index: 8, kind: input, shape index: {}]
  %s9 = inlined_call_operand.hbm [shape: f32[4,8], index: 9, kind: output, shape index: {}]
  %s10 = sld [smem:[#allocation0]]
  $region46: #{tpu_custom_call.1} parent=0
    _
  %s12 = ssub.s32 1, %s10
  %s13 = scalar_select 0, %s12, %s10
  %14 = sst [smem:[#allocation2]] %s3
  %15 = sst [smem:[#allocation3]] %s6
  $region1: #{tpu_custom_call.1} parent=0
    #allocation4 [shape = 'u8[4096]{0}', space=vmem, size = 0x1000, scoped, tag = 'output window, operand 0, single buffered']
    #allocation5 [shape = 's32[1]{0}', space=sflag, size = 0x4, scoped, tag = 'scoped memory for tpu_custom_call.1']
    %16 = vsyncpa [#allocation5], 0
    // Predicated region
    $region2: #{tpu_custom_call.1} parent=1 // pred_check
      _
    $region3: #{tpu_custom_call.1} parent=1 // pred_check_branch
      %18 = sbr.rel (0) target = $region5
    $region4: #{tpu_custom_call.1} parent=1 // pred_region
      _
    $region5: #{tpu_custom_call.1} parent=1 // pred_fallthru
      _
    // Predicated region
    $region6: #{tpu_custom_call.1} parent=1 // pred_check
      _
    $region7: #{tpu_custom_call.1} parent=1 // pred_check_branch
      %20 = sbr.rel (0) target = $region9
    $region8: #{tpu_custom_call.1} parent=1 // pred_region
      _
    $region9: #{tpu_custom_call.1} parent=1 // pred_fallthru
      _
    // Predicated region
    $region10: #{tpu_custom_call.1} parent=1 // pred_check
      _
    $region11: #{tpu_custom_call.1} parent=1 // pred_check_branch
      %22 = sbr.rel (0) target = $region13
    $region12: #{tpu_custom_call.1} parent=1 // pred_region
      _
    $region13: #{tpu_custom_call.1} parent=1 // pred_fallthru
      _
    // Predicated region
    $region14: #{tpu_custom_call.1} parent=1 // pred_check
      _
    $region15: #{tpu_custom_call.1} parent=1 // pred_check_branch
      %24 = sbr.rel (0) target = $region17
    $region16: #{tpu_custom_call.1} parent=1 // pred_region
      _
    $region17: #{tpu_custom_call.1} parent=1 // pred_fallthru
      _
    // Predicated region
    $region18: #{tpu_custom_call.1} parent=1 // pred_check
      _
    $region19: #{tpu_custom_call.1} parent=1 // pred_check_branch
      %26 = sbr.rel (0) target = $region21
    $region20: #{tpu_custom_call.1} parent=1 // pred_region
      _
    $region21: #{tpu_custom_call.1} parent=1 // pred_fallthru
      _
    // Predicated region
    $region22: #{tpu_custom_call.1} parent=1 // pred_check
      _
    $region23: #{tpu_custom_call.1} parent=1 // pred_check_branch
      %28 = sbr.rel (0) target = $region25
    $region24: #{tpu_custom_call.1} parent=1 // pred_region
      _
    $region25: #{tpu_custom_call.1} parent=1 // pred_fallthru
      _
    // Predicated region
    $region26: #{tpu_custom_call.1} parent=1 // pred_check
      _
    $region27: #{tpu_custom_call.1} parent=1 // pred_check_branch
      %30 = sbr.rel (0) target = $region29
    $region28: #{tpu_custom_call.1} parent=1 // pred_region
      _
    $region29: #{tpu_custom_call.1} parent=1 // pred_fallthru
      _
    // Predicated region
    $region30: #{tpu_custom_call.1} parent=1 // pred_check
      _
    $region31: #{tpu_custom_call.1} parent=1 // pred_check_branch
      %32 = sbr.rel (0) target = $region33
    $region32: #{tpu_custom_call.1} parent=1 // pred_region
      _
    $region33: #{tpu_custom_call.1} parent=1 // pred_fallthru
      _
    // Predicated region
    $region34: #{tpu_custom_call.1} parent=1 // pred_check
      _
    $region35: #{tpu_custom_call.1} parent=1 // pred_check_branch
      %34 = sbr.rel (0) target = $region37
    $region36: #{tpu_custom_call.1} parent=1 // pred_region
      _
    $region37: #{tpu_custom_call.1} parent=1 // pred_fallthru
      _
    %v36 = vld [vmem:[%s0] sm:$0xff]
    %v37 = vpack.c.bf16 %v36, %v36
    %v38 = vld [vmem:[%s1] sm:$0xf]
    %v39 = vld [vmem:[%s1 + $0x4] sm:$0xf]
    %v40 = vld [vmem:[%s1 + $0x8] sm:$0xf]
    %v41 = vld [vmem:[%s1 + $0xc] sm:$0xf]
    %v42 = vld [vmem:[%s2] sm:$0x1]
    %v44 = vlaneseq
    %v45 = vshrl.u32 %v44, 7
    %v46 = vsub.s32 0, %v45
    %v47 = vrot.slane %v42, %v46
    %v53 = vunpack.c.l.b16 %v38
    %v54 = vunpack.c.l.b16 %v39
    %v55 = vunpack.c.l.b16 %v40
    %v56 = vunpack.c.l.b16 %v41
    %v57 = vpack.c.b16 %v54, %v53
    %v58 = vpack.c.b16 %v56, %v55
    %vm61 = vcmask 261120
    %v63 = vsel %vm61, %v37, 0
    %65 = vmatprep.subr.bf16.mxu0 0
    %66 = vmatpush1.bf16.msra.mxu0 %v57
    %67 = vmatprep.subr.bf16.mxu0 0
    %68 = vmatpush1.bf16.msra.mxu0 %v58
    %69 = vmatprep.subr.bf16.mxu0 0
    %70 = vmatpush1.bf16.msra.mxu0 0
    %71 = vmatprep.subr.bf16.mxu0 0
    %72 = vmatpush1.bf16.msra.mxu0 0
    %73 = vmatprep.subr.bf16.mxu0 0
    %74 = vmatpush1.bf16.msra.mxu0 0
    %75 = vmatprep.subr.bf16.mxu0 0
    %76 = vmatpush1.bf16.msra.mxu0 0
    %77 = vmatprep.subr.bf16.mxu0 0
    %78 = vmatpush1.bf16.msra.mxu0 0
    %79 = vmatprep.subr.bf16.mxu0 0
    %80 = vmatpush1.bf16.msra.mxu0 0
    %81 = vmatprep.subr.bf16.mxu0 0
    %82 = vmatpush1.bf16.msra.mxu0 0
    %83 = vmatprep.subr.bf16.mxu0 0
    %84 = vmatpush1.bf16.msra.mxu0 0
    %85 = vmatprep.subr.bf16.mxu0 0
    %86 = vmatpush1.bf16.msra.mxu0 0
    %87 = vmatprep.subr.bf16.mxu0 0
    %88 = vmatpush1.bf16.msra.mxu0 0
    %89 = vmatprep.subr.bf16.mxu0 0
    %90 = vmatpush1.bf16.msra.mxu0 0
    %91 = vmatprep.subr.bf16.mxu0 0
    %92 = vmatpush1.bf16.msra.mxu0 0
    %93 = vmatprep.subr.bf16.mxu0 0
    %94 = vmatpush1.bf16.msra.mxu0 0
    %95 = vmatprep.subr.bf16.mxu0 0
    %96 = vmatpush1.bf16.msra.mxu0 0
    %97 = vmatprep.mubr.bf16.mxu0 0
    %98 = vmatmul.mubr.bf16.gmra.mrb[0].mxu0 %v63
    %v99 = vpop.f32.mrb[0].mxu0
    %v100 = vadd.f32 %v47, %v99
    %v101 = vpop.f32.mrb[0].mxu0
    %v102 = vpop.f32.mrb[0].mxu0
    %v103 = vpop.f32.mrb[0].mxu0
    %104 = vdwg.mxu0
    %s105 = sld [smem:[#allocation2]]
    %vm106 = vcmp.gt.f32.partialorder %v100, 0.0
    %v107 = vstv %s105
    %v108 = vmul.f32 %v107, %v100
    %v109 = vsel %vm106, %v100, %v108
    %v110 = vmax.f32 %v109, 0.0
    %v111 = vpack.c.bf16 %v110, %v110
    %v112 = vld [vmem:[%s4] sm:$0xf]
    %v113 = vld [vmem:[%s4 + $0x4] sm:$0xf]
    %v114 = vld [vmem:[%s4 + $0x8] sm:$0xf]
    %v115 = vld [vmem:[%s4 + $0xc] sm:$0xf]
    %v116 = vld [vmem:[%s4 + $0x10] sm:$0xf]
    %v117 = vld [vmem:[%s4 + $0x14] sm:$0xf]
    %v118 = vld [vmem:[%s4 + $0x18] sm:$0xf]
    %v119 = vld [vmem:[%s4 + $0x1c] sm:$0xf]
    %v120 = vld [vmem:[%s5] sm:$0x1]
    %v122 = vlaneseq
    %v123 = vshrl.u32 %v122, 7
    %v124 = vsub.s32 0, %v123
    %v125 = vrot.slane %v120, %v124
    %v135 = vunpack.c.l.b16 %v112
    %v136 = vunpack.c.l.b16 %v113
    %v137 = vunpack.c.l.b16 %v114
    %v138 = vunpack.c.l.b16 %v115
    %v139 = vunpack.c.l.b16 %v116
    %v140 = vunpack.c.l.b16 %v117
    %v141 = vunpack.c.l.b16 %v118
    %v142 = vunpack.c.l.b16 %v119
    %v143 = vpack.c.b16 %v136, %v135
    %v144 = vpack.c.b16 %v138, %v137
    %v145 = vpack.c.b16 %v140, %v139
    %v146 = vpack.c.b16 %v142, %v141
    %vm151 = vcmask 523264
    %v153 = vsel %vm151, %v111, 0
    %155 = vmatprep.subr.bf16.mxu0 0
    %156 = vmatpush1.bf16.msra.mxu0 %v143
    %157 = vmatprep.subr.bf16.mxu0 0
    %158 = vmatpush1.bf16.msra.mxu0 %v144
    %159 = vmatprep.subr.bf16.mxu0 0
    %160 = vmatpush1.bf16.msra.mxu0 %v145
    %161 = vmatprep.subr.bf16.mxu0 0
    %162 = vmatpush1.bf16.msra.mxu0 %v146
    %163 = vmatprep.subr.bf16.mxu0 0
    %164 = vmatpush1.bf16.msra.mxu0 0
    %165 = vmatprep.subr.bf16.mxu0 0
    %166 = vmatpush1.bf16.msra.mxu0 0
    %167 = vmatprep.subr.bf16.mxu0 0
    %168 = vmatpush1.bf16.msra.mxu0 0
    %169 = vmatprep.subr.bf16.mxu0 0
    %170 = vmatpush1.bf16.msra.mxu0 0
    %171 = vmatprep.subr.bf16.mxu0 0
    %172 = vmatpush1.bf16.msra.mxu0 0
    %173 = vmatprep.subr.bf16.mxu0 0
    %174 = vmatpush1.bf16.msra.mxu0 0
    %175 = vmatprep.subr.bf16.mxu0 0
    %176 = vmatpush1.bf16.msra.mxu0 0
    %177 = vmatprep.subr.bf16.mxu0 0
    %178 = vmatpush1.bf16.msra.mxu0 0
    %179 = vmatprep.subr.bf16.mxu0 0
    %180 = vmatpush1.bf16.msra.mxu0 0
    %181 = vmatprep.subr.bf16.mxu0 0
    %182 = vmatpush1.bf16.msra.mxu0 0
    %183 = vmatprep.subr.bf16.mxu0 0
    %184 = vmatpush1.bf16.msra.mxu0 0
    %185 = vmatprep.subr.bf16.mxu0 0
    %186 = vmatpush1.bf16.msra.mxu0 0
    %187 = vmatprep.mubr.bf16.mxu0 0
    %188 = vmatmul.mubr.bf16.gmra.mrb[0].mxu0 %v153
    %v189 = vpop.f32.mrb[0].mxu0
    %v190 = vadd.f32 %v125, %v189
    %v191 = vpop.f32.mrb[0].mxu0
    %v192 = vpop.f32.mrb[0].mxu0
    %v193 = vpop.f32.mrb[0].mxu0
    %194 = vdwg.mxu0
    %s195 = sld [smem:[#allocation3]]
    %vm196 = vcmp.gt.f32.partialorder %v190, 0.0
    %v197 = vstv %s195
    %v198 = vmul.f32 %v197, %v190
    %v199 = vsel %vm196, %v190, %v198
    %v200 = vmax.f32 %v199, 0.0
    %v201 = vpack.c.bf16 %v200, %v200
    %v202 = vld [vmem:[%s7] sm:$0xf]
    %v203 = vld [vmem:[%s7 + $0x4] sm:$0xf]
    %v204 = vld [vmem:[%s8] sm:$0x1]
    %v206 = vlaneseq
    %v207 = vshrl.u32 %v206, 7
    %v208 = vsub.s32 0, %v207
    %v209 = vrot.slane %v204, %v208
    %v213 = vunpack.c.l.b16 %v202
    %v214 = vunpack.c.l.b16 %v203
    %v215 = vpack.c.b16 %v214, %v213
    %vm217 = vcmask 130048
    %v219 = vsel %vm217, %v201, 0
    %221 = vmatprep.subr.bf16.mxu0 0
    %222 = vmatpush1.bf16.msra.mxu0 %v215
    %223 = vmatprep.subr.bf16.mxu0 0
    %224 = vmatpush1.bf16.msra.mxu0 0
    %225 = vmatprep.subr.bf16.mxu0 0
    %226 = vmatpush1.bf16.msra.mxu0 0
    %227 = vmatprep.subr.bf16.mxu0 0
    %228 = vmatpush1.bf16.msra.mxu0 0
    %229 = vmatprep.subr.bf16.mxu0 0
    %230 = vmatpush1.bf16.msra.mxu0 0
    %231 = vmatprep.subr.bf16.mxu0 0
    %232 = vmatpush1.bf16.msra.mxu0 0
    %233 = vmatprep.subr.bf16.mxu0 0
    %234 = vmatpush1.bf16.msra.mxu0 0
    %235 = vmatprep.subr.bf16.mxu0 0
    %236 = vmatpush1.bf16.msra.mxu0 0
    %237 = vmatprep.subr.bf16.mxu0 0
    %238 = vmatpush1.bf16.msra.mxu0 0
    %239 = vmatprep.subr.bf16.mxu0 0
    %240 = vmatpush1.bf16.msra.mxu0 0
    %241 = vmatprep.subr.bf16.mxu0 0
    %242 = vmatpush1.bf16.msra.mxu0 0
    %243 = vmatprep.subr.bf16.mxu0 0
    %244 = vmatpush1.bf16.msra.mxu0 0
    %245 = vmatprep.subr.bf16.mxu0 0
    %246 = vmatpush1.bf16.msra.mxu0 0
    %247 = vmatprep.subr.bf16.mxu0 0
    %248 = vmatpush1.bf16.msra.mxu0 0
    %249 = vmatprep.subr.bf16.mxu0 0
    %250 = vmatpush1.bf16.msra.mxu0 0
    %251 = vmatprep.subr.bf16.mxu0 0
    %252 = vmatpush1.bf16.msra.mxu0 0
    %253 = vmatprep.mubr.bf16.mxu0 0
    %254 = vmatmul.mubr.bf16.gmra.mrb[0].mxu0 %v219
    %v255 = vpop.f32.mrb[0].mxu0
    %v256 = vadd.f32 %v209, %v255
    %v257 = vpop.f32.mrb[0].mxu0
    %v258 = vpop.f32.mrb[0].mxu0
    %v259 = vpop.f32.mrb[0].mxu0
    %260 = vdwg.mxu0
    %vm261 = vcmask 64512
    %262 = vst.msk [vmem:[#allocation4] sm:$0xff] %vm261, %v256
    // Predicated region
    $region38: #{tpu_custom_call.1} parent=1 // pred_check
      _
    $region39: #{tpu_custom_call.1} parent=1 // pred_check_branch
      %264 = sbr.rel (0) target = $region41
    $region40: #{tpu_custom_call.1} parent=1 // pred_region
      %s266 = ssub.s32 128, 64
      %267 = vsyncadd [#allocation5], %s266
      %s268 = sshll.u32 [#allocation4], 4
      %s269 = int_to_ptr.vmem [resolvable:$true] %s268
      %274 = dma.vmem_to_hbm [thread:$0]  %s269, 64, %s9, [#allocation5], 64, 64, 4
    $region41: #{tpu_custom_call.1} parent=1 // pred_fallthru
      _
    // Predicated region
    $region42: #{tpu_custom_call.1} parent=1 // pred_check
      _
    $region43: #{tpu_custom_call.1} parent=1 // pred_check_branch
      %276 = sbr.rel (0) target = $region45
    $region44: #{tpu_custom_call.1} parent=1 // pred_region
      %277 = dma.done [#allocation5], 128
    $region45: #{tpu_custom_call.1} parent=1 // pred_fallthru
      _
    %278 = vsyncpa [#allocation5], 1

</llo_original>
